<compile_context>
chip_gen: v7x
topology: tpu7x:2x2x1
jax: 0.10.0
libtpu: 0.0.40
codegen_flags: <defaults>
</compile_context>

<pallas_src>
import functools

import jax
import jax.numpy as jnp
from jax import lax
from jax.experimental import pallas as pl
from jax.experimental.pallas import tpu as pltpu


def _tile(dim, pref):
    """Pick a tile size: preferred if it divides the dim, else the full dim."""
    if dim <= pref:
        return dim
    return pref if dim % pref == 0 else dim


# ----------------------------------------------------------------------------
# Generic tiled matmul (linear projection)
# ----------------------------------------------------------------------------
def _matmul_kernel(x_ref, w_ref, o_ref, acc_ref):
    @pl.when(pl.program_id(2) == 0)
    def _():
        acc_ref[...] = jnp.zeros_like(acc_ref)

    # Keep operands in their storage dtype (bf16-friendly); accumulate in f32.
    acc_ref[...] += jnp.dot(x_ref[...], w_ref[...],
                            preferred_element_type=jnp.float32)

    @pl.when(pl.program_id(2) == pl.num_programs(2) - 1)
    def _():
        o_ref[...] = acc_ref[...].astype(o_ref.dtype)


def linear(x, w, *, tm=256, tn=256, tk=512):
    m, kdim = x.shape
    _, n = w.shape
    tm, tn, tk = _tile(m, tm), _tile(n, tn), _tile(kdim, tk)
    grid = (m // tm, n // tn, kdim // tk)
    itemsize = jnp.dtype(x.dtype).itemsize
    cost = pl.CostEstimate(
        flops=2 * m * n * kdim, transcendentals=0,
        bytes_accessed=(m * kdim + kdim * n + m * n) * itemsize)
    return pl.pallas_call(
        _matmul_kernel,
        out_shape=jax.ShapeDtypeStruct((m, n), x.dtype),
        grid=grid,
        in_specs=[pl.BlockSpec((tm, tk), lambda i, j, k: (i, k)),
                  pl.BlockSpec((tk, tn), lambda i, j, k: (k, j))],
        out_specs=pl.BlockSpec((tm, tn), lambda i, j, k: (i, j)),
        scratch_shapes=[pltpu.VMEM((tm, tn), jnp.float32)],
        compiler_params=pltpu.CompilerParams(
            dimension_semantics=("parallel", "parallel", "arbitrary")),
        cost_estimate=cost,
    )(x, w)


# ----------------------------------------------------------------------------
# RMSNorm fused into a projection matmul (used for input_ln + fused QKV)
# ----------------------------------------------------------------------------
def _rmsnorm_matmul_kernel(x_ref, g_ref, w_ref, o_ref, xn_scr, *, eps):
    @pl.when(pl.program_id(1) == 0)
    def _():
        x = x_ref[...].astype(jnp.float32)
        var = jnp.mean(x * x, axis=-1, keepdims=True)
        xn = x * lax.rsqrt(var + eps) * g_ref[...].astype(jnp.float32)
        xn_scr[...] = xn.astype(xn_scr.dtype)

    o_ref[...] = jnp.dot(xn_scr[...], w_ref[...],
                         preferred_element_type=jnp.float32).astype(o_ref.dtype)


def rmsnorm_linear(x, gamma, w, *, eps, tm=256, tn=256):
    m, d = x.shape
    _, n = w.shape
    tm, tn = _tile(m, tm), _tile(n, tn)
    grid = (m // tm, n // tn)
    return pl.pallas_call(
        functools.partial(_rmsnorm_matmul_kernel, eps=eps),
        out_shape=jax.ShapeDtypeStruct((m, n), x.dtype),
        grid=grid,
        in_specs=[pl.BlockSpec((tm, d), lambda i, j: (i, 0)),
                  pl.BlockSpec((1, d), lambda i, j: (0, 0)),
                  pl.BlockSpec((d, tn), lambda i, j: (0, j))],
        out_specs=pl.BlockSpec((tm, tn), lambda i, j: (i, j)),
        scratch_shapes=[pltpu.VMEM((tm, d), x.dtype)],
        compiler_params=pltpu.CompilerParams(
            dimension_semantics=("parallel", "arbitrary")),
    )(x, gamma.reshape(1, d), w)


# ----------------------------------------------------------------------------
# Sliding-window causal flash attention (online softmax, GQA via index_map)
# ----------------------------------------------------------------------------
def _flash_attn_kernel(q_ref, k_ref, v_ref, o_ref, m_scr, l_scr, acc_scr, *,
                       scale, window, blk, n_kv):
    qi = pl.program_id(1)
    ki = pl.program_id(2)

    @pl.when(ki == 0)
    def _():
        m_scr[...] = jnp.full(m_scr.shape, -1e30, jnp.float32)
        l_scr[...] = jnp.zeros_like(l_scr)
        acc_scr[...] = jnp.zeros_like(acc_scr)

    # Intended KV block; negative means "before the sequence start" (the DMA
    # index_map clamped it to 0) -> skip all compute.
    kv_blk = qi - (n_kv - 1) + ki

    @pl.when(kv_blk >= 0)
    def _():
        q = q_ref[0]
        k = k_ref[0]
        v = v_ref[0]
        # q @ k^T expressed via dot_general (no explicit transpose).
        s = lax.dot_general(q, k, (((1,), (1,)), ((), ())),
                            preferred_element_type=jnp.float32) * scale
        row = qi * blk + lax.broadcasted_iota(jnp.int32, s.shape, 0)
        col = kv_blk * blk + lax.broadcasted_iota(jnp.int32, s.shape, 1)
        mask = (col <= row) & ((row - col) < window)   # causal + sliding window
        s = jnp.where(mask, s, -1e30)                  # keep mask math in f32

        m_prev = m_scr[...]
        m_new = jnp.maximum(m_prev, jnp.max(s, axis=-1, keepdims=True))
        alpha = jnp.exp(m_prev - m_new)
        p = jnp.exp(s - m_new)
        l_scr[...] = alpha * l_scr[...] + jnp.sum(p, axis=-1, keepdims=True)
        acc_scr[...] = alpha * acc_scr[...] + jnp.dot(
            p.astype(v.dtype), v, preferred_element_type=jnp.float32)
        m_scr[...] = m_new

    @pl.when(ki == n_kv - 1)
    def _():
        inv_l = pl.reciprocal(l_scr[...], approx=True)
        o_ref[0] = (acc_scr[...] * inv_l).astype(o_ref.dtype)


def flash_attention(q, k, v, *, num_heads, num_kv_heads, scale, window):
    BH, S, Dh = q.shape
    rep = num_heads // num_kv_heads
    blk = 128 if S % 128 == 0 else S          # tq == tkv
    n_q = S // blk
    # Only KV blocks that can intersect the causal sliding window are visited.
    n_kv = min((max(window, 1) - 1) // blk + 2, n_q)
    if window >= S:
        n_kv = n_q

    def q_map(bh, qi, ki):
        return (bh, qi, 0)

    def kv_map(bh, qi, ki):
        b = bh // num_heads
        h = bh % num_heads
        kv_head = h // rep                      # GQA: no jnp.repeat, reuse via DMA
        kv_blk = jnp.maximum(qi - (n_kv - 1) + ki, 0)
        return (b * num_kv_heads + kv_head, kv_blk, 0)

    kern = functools.partial(_flash_attn_kernel, scale=scale, window=window,
                             blk=blk, n_kv=n_kv)
    return pl.pallas_call(
        kern,
        out_shape=jax.ShapeDtypeStruct((BH, S, Dh), q.dtype),
        grid=(BH, n_q, n_kv),
        in_specs=[pl.BlockSpec((1, blk, Dh), q_map),
                  pl.BlockSpec((1, blk, Dh), kv_map),
                  pl.BlockSpec((1, blk, Dh), kv_map)],
        out_specs=pl.BlockSpec((1, blk, Dh), q_map),
        scratch_shapes=[pltpu.VMEM((blk, 1), jnp.float32),
                        pltpu.VMEM((blk, 1), jnp.float32),
                        pltpu.VMEM((blk, Dh), jnp.float32)],
        compiler_params=pltpu.CompilerParams(
            dimension_semantics=("parallel", "parallel", "arbitrary")),
    )(q, k, v)


# ----------------------------------------------------------------------------
# Mistral MLP with fused post-attention RMSNorm
# ----------------------------------------------------------------------------
def _mlp_kernel(x_ref, g_ref, wg_ref, wu_ref, wd_ref, o_ref, xn_scr, acc_ref,
                *, eps):
    ii = pl.program_id(1)

    @pl.when(ii == 0)
    def _():
        x = x_ref[...].astype(jnp.float32)
        var = jnp.mean(x * x, axis=-1, keepdims=True)
        xn = x * lax.rsqrt(var + eps) * g_ref[...].astype(jnp.float32)
        xn_scr[...] = xn.astype(xn_scr.dtype)
        acc_ref[...] = jnp.zeros_like(acc_ref)

    xn = xn_scr[...]
    gt = jnp.dot(xn, wg_ref[...], preferred_element_type=jnp.float32)
    ut = jnp.dot(xn, wu_ref[...], preferred_element_type=jnp.float32)
    h = (jax.nn.silu(gt) * ut).astype(xn.dtype)
    acc_ref[...] += jnp.dot(h, wd_ref[...], preferred_element_type=jnp.float32)

    @pl.when(ii == pl.num_programs(1) - 1)
    def _():
        o_ref[...] = acc_ref[...].astype(o_ref.dtype)


def mistral_mlp(x, gamma, p, *, eps, tm=256, ti=512):
    B, S, D = x.shape
    m = B * S
    x2 = x.reshape(m, D)
    I = p["wg"].shape[1]
    tm_, ti_ = _tile(m, tm), _tile(I, ti)
    grid = (m // tm_, I // ti_)
    itemsize = jnp.dtype(x.dtype).itemsize
    cost = pl.CostEstimate(flops=6 * m * D * I, transcendentals=m * I,
                           bytes_accessed=(2 * m * D + 3 * D * I) * itemsize)
    out = pl.pallas_call(
        functools.partial(_mlp_kernel, eps=eps),
        out_shape=jax.ShapeDtypeStruct((m, D), x.dtype),
        grid=grid,
        in_specs=[pl.BlockSpec((tm_, D), lambda i, ii: (i, 0)),
                  pl.BlockSpec((1, D), lambda i, ii: (0, 0)),
                  pl.BlockSpec((D, ti_), lambda i, ii: (0, ii)),
                  pl.BlockSpec((D, ti_), lambda i, ii: (0, ii)),
                  pl.BlockSpec((ti_, D), lambda i, ii: (ii, 0))],
        out_specs=pl.BlockSpec((tm_, D), lambda i, ii: (i, 0)),
        scratch_shapes=[pltpu.VMEM((tm_, D), x.dtype),
                        pltpu.VMEM((tm_, D), jnp.float32)],
        compiler_params=pltpu.CompilerParams(
            dimension_semantics=("parallel", "arbitrary")),
        cost_estimate=cost,
    )(x2, gamma.reshape(1, D), p["wg"], p["wu"], p["wd"])
    return out.reshape(B, S, D)


# ----------------------------------------------------------------------------
# Titans neural memory: chunked associative-memory update + retrieval,
# memory matrix column-tiled so the (D, D) state never has to fit VMEM whole.
# ----------------------------------------------------------------------------
def _memory_kernel(k_ref, v_ref, q_ref, m0_ref, o_ref, m_scr, s_scr, *,
                   chunk, n_chunks, eta, theta, alpha):
    m_scr[...] = m0_ref[...].astype(jnp.float32)
    s_scr[...] = jnp.zeros_like(s_scr)

    def body(c, carry):
        lo = pl.multiple_of(c * chunk, chunk)
        kt = k_ref[0, pl.ds(lo, chunk), :]          # (chunk, D)
        vt = v_ref[0, pl.ds(lo, chunk), :]          # (chunk, tn)
        qt = q_ref[0, pl.ds(lo, chunk), :]          # (chunk, tn)
        # grad of 0.5*||k M - v||^2 restricted to this column tile:
        #   grad = (k^T k) M[:, tile] - k^T v[:, tile]
        g = lax.dot_general(kt, kt, (((0,), (0,)), ((), ())),
                            preferred_element_type=jnp.float32)   # (D, D)
        u = lax.dot_general(kt, vt, (((0,), (0,)), ((), ())),
                            preferred_element_type=jnp.float32)   # (D, tn)
        grad = jnp.dot(g, m_scr[...], preferred_element_type=jnp.float32) - u
        s_scr[...] = eta * s_scr[...] - theta * grad               # momentum
        m_scr[...] = (1.0 - alpha) * m_scr[...] + s_scr[...]       # decay+step
        # retrieve this chunk against the just-updated memory
        o_ref[0, pl.ds(lo, chunk), :] = jnp.dot(
            qt.astype(jnp.float32), m_scr[...],
            preferred_element_type=jnp.float32).astype(o_ref.dtype)
        return carry

    lax.fori_loop(0, n_chunks, body, 0, unroll=True)


def neural_memory(x, p, chunk_size, *, tn=128):
    # TODO(synk): titans-pytorch NeuralMemory uses an MLP memory with
    # data-dependent per-token momentum/decay/LR gates and retrieval norms;
    # here a linear associative memory with fixed eta/theta/alpha is used.
    B, S, D = x.shape
    x2 = x.reshape(B * S, D)
    kvq = linear(x2, p["wkvq"])                     # fused K|V|Q projection
    kvq = kvq.reshape(B, S, 3, D)
    k, v, q = kvq[:, :, 0, :], kvq[:, :, 1, :], kvq[:, :, 2, :]

    n_chunks = S // chunk_size
    tnm = _tile(D, tn)
    kern = functools.partial(_memory_kernel, chunk=chunk_size,
                             n_chunks=n_chunks, eta=0.9, theta=0.1, alpha=0.01)
    # TODO(synk): at real S/D the full-K (1, S, D) block should be streamed per
    # chunk (manual double-buffer) instead of held resident per grid step.
    out = pl.pallas_call(
        kern,
        out_shape=jax.ShapeDtypeStruct((B, S, D), x.dtype),
        grid=(B, D // tnm),
        in_specs=[pl.BlockSpec((1, S, D), lambda b, j: (b, 0, 0)),
                  pl.BlockSpec((1, S, tnm), lambda b, j: (b, 0, j)),
                  pl.BlockSpec((1, S, tnm), lambda b, j: (b, 0, j)),
                  pl.BlockSpec((D, tnm), lambda b, j: (0, j))],
        out_specs=pl.BlockSpec((1, S, tnm), lambda b, j: (b, 0, j)),
        scratch_shapes=[pltpu.VMEM((D, tnm), jnp.float32),
                        pltpu.VMEM((D, tnm), jnp.float32)],
        compiler_params=pltpu.CompilerParams(
            dimension_semantics=("parallel", "parallel")),
    )(k, v, q, p["m0"])
    return linear(out.reshape(B * S, D), p["wo"]).reshape(B, S, D)


# ----------------------------------------------------------------------------
# RoPE + attention wrapper (glue)
# ----------------------------------------------------------------------------
def rope_cos_sin(S, dh, theta=10000.0, dtype=jnp.float32):
    inv_freq = 1.0 / (theta ** (jnp.arange(0, dh, 2, dtype=jnp.float32) / dh))
    pos = jnp.arange(S, dtype=jnp.float32)
    freqs = jnp.outer(pos, inv_freq)
    emb = jnp.concatenate([freqs, freqs], axis=-1)
    return jnp.cos(emb).astype(dtype), jnp.sin(emb).astype(dtype)


def _rotate_half(x):
    x1, x2 = jnp.split(x, 2, axis=-1)
    return jnp.concatenate([-x2, x1], axis=-1)


def apply_rope(q, k, cos, sin):
    cos = cos[None, None]
    sin = sin[None, None]
    return q * cos + _rotate_half(q) * sin, k * cos + _rotate_half(k) * sin


def mistral_attention(x, ln_w, p, *, num_heads, num_kv_heads, head_dim,
                      window, eps):
    B, S, D = x.shape
    # input RMSNorm fused into the single QKV projection matmul
    qkv = rmsnorm_linear(x.reshape(B * S, D), ln_w, p["wqkv"], eps=eps)
    q_sz = num_heads * head_dim
    kv_sz = num_kv_heads * head_dim
    # TODO(synk): at real head_dim (128) these reshape/transposes can be folded
    # into the attention BlockSpec index_maps instead of JAX-side transposes.
    q = qkv[:, :q_sz].reshape(B, S, num_heads, head_dim).transpose(0, 2, 1, 3)
    k = qkv[:, q_sz:q_sz + kv_sz].reshape(B, S, num_kv_heads, head_dim
                                          ).transpose(0, 2, 1, 3)
    v = qkv[:, q_sz + kv_sz:].reshape(B, S, num_kv_heads, head_dim
                                      ).transpose(0, 2, 1, 3)
    cos, sin = rope_cos_sin(S, head_dim, dtype=x.dtype)
    q, k = apply_rope(q, k, cos, sin)
    q = q.reshape(B * num_heads, S, head_dim)
    k = k.reshape(B * num_kv_heads, S, head_dim)
    v = v.reshape(B * num_kv_heads, S, head_dim)
    o = flash_attention(q, k, v, num_heads=num_heads,
                        num_kv_heads=num_kv_heads,
                        scale=head_dim ** -0.5, window=window)
    o = (o.reshape(B, num_heads, S, head_dim)
          .transpose(0, 2, 1, 3)
          .reshape(B * S, num_heads * head_dim))
    return linear(o, p["wo"]).reshape(B, S, D)


# ----------------------------------------------------------------------------
# TitanDecoderLayer forward
# ----------------------------------------------------------------------------
def titan_decoder_layer(x, params, *, gated, segment_size, num_heads,
                        num_kv_heads, head_dim, eps=1e-6):
    if not gated:  # Memory As Layer (MAL)
        x = x + neural_memory(x, params["memory"], segment_size)

    residual = x
    h = mistral_attention(
        x, params["input_ln"], params["attn"], num_heads=num_heads,
        num_kv_heads=num_kv_heads, head_dim=head_dim,
        window=segment_size, eps=eps)
    if gated:  # Memory As Gate (MAG), per reference: h = mem(attn); h *= sigmoid(h)
        mem = neural_memory(h, params["memory"], segment_size)
        h = mem * jax.nn.sigmoid(mem)
    x = residual + h

    residual = x
    h = mistral_mlp(x, params["post_ln"], params["mlp"], eps=eps)
    return residual + h


def init_params(key, D, I, num_heads, num_kv_heads, head_dim):
    ks = jax.random.split(key, 12)
    s = 0.02

    def w(k, shape):
        return jax.random.normal(k, shape, jnp.float32) * s

    wq = w(ks[0], (D, num_heads * head_dim))
    wk = w(ks[1], (D, num_kv_heads * head_dim))
    wv = w(ks[2], (D, num_kv_heads * head_dim))
    mk = w(ks[7], (D, D))
    mv = w(ks[8], (D, D))
    mq = w(ks[9], (D, D))
    return {
        "input_ln": jnp.ones((D,), jnp.float32),
        "post_ln": jnp.ones((D,), jnp.float32),
        "attn": {
            "wqkv": jnp.concatenate([wq, wk, wv], axis=1),  # fused QKV weight
            "wo": w(ks[3], (num_heads * head_dim, D)),
        },
        "mlp": {
            "wg": w(ks[4], (D, I)),
            "wu": w(ks[5], (D, I)),
            "wd": w(ks[6], (I, D)),
        },
        "memory": {
            "wkvq": jnp.concatenate([mk, mv, mq], axis=1),  # fused K|V|Q weight
            "wo": w(ks[10], (D, D)),
            "m0": w(ks[11], (D, D)),
        },
    }


if __name__ == "__main__":
    B, S, D = 2, 16, 32
    num_heads, num_kv_heads = 4, 2
    head_dim = D // num_heads
    intermediate = 64
    segment_size = 8  # chunk_size == sliding_window

    key = jax.random.PRNGKey(0)
    pkey, xkey = jax.random.split(key)
    params = init_params(pkey, D, intermediate, num_heads, num_kv_heads,
                         head_dim)
    x = jax.random.normal(xkey, (B, S, D), jnp.float32)

    out_mal = titan_decoder_layer(
        x, params, gated=False, segment_size=segment_size,
        num_heads=num_heads, num_kv_heads=num_kv_heads, head_dim=head_dim)
    out_mag = titan_decoder_layer(
        x, params, gated=True, segment_size=segment_size,
        num_heads=num_heads, num_kv_heads=num_kv_heads, head_dim=head_dim)
    jax.block_until_ready((out_mal, out_mag))
    assert out_mal.shape == (B, S, D) and out_mag.shape == (B, S, D)
    assert bool(jnp.all(jnp.isfinite(out_mal)))
    assert bool(jnp.all(jnp.isfinite(out_mag)))
    print("KERNEL_OK")
</pallas_src>

<mosaic_0001>
module attributes {stable_mosaic.version = 11 : i64} {
  func.func @_matmul_kernel(%arg0: i32, %arg1: i32, %arg2: i32, %arg3: memref<32x32xf32, #tpu.memory_space<vmem>>, %arg4: memref<32x96xf32, #tpu.memory_space<vmem>>, %arg5: memref<32x96xf32, #tpu.memory_space<vmem>>, %arg6: memref<32x96xf32, #tpu.memory_space<vmem>>) attributes {dimension_semantics = [#tpu.dimension_semantics<parallel>, #tpu.dimension_semantics<parallel>, #tpu.dimension_semantics<arbitrary>], iteration_bounds = array<i64: 1, 1, 1>, scalar_prefetch = 0 : i64, scratch_operands = 1 : i64, tpu.core_type = #tpu.core_type<tc>, window_params = [{transform_indices = @transform_0, window_bounds = array<i64: 32, 32>}, {transform_indices = @transform_1, window_bounds = array<i64: 32, 96>}, {transform_indices = @transform_2, window_bounds = array<i64: 32, 96>}]} {
    %c0_i32 = arith.constant 0 : i32
    %0 = arith.cmpi eq, %arg2, %c0_i32 : i32
    %1 = arith.extui %0 : i1 to i32
    %c0_i32_0 = arith.constant 0 : i32
    %2 = arith.cmpi ne, %1, %c0_i32_0 : i32
    scf.if %2 {
      %cst_10 = arith.constant 0.000000e+00 : f32
      %12 = vector.broadcast %cst_10 : f32 to vector<32x96xf32>
      %c0_11 = arith.constant 0 : index
      %c0_12 = arith.constant 0 : index
      %13 = vector.load %arg6[%c0_11, %c0_12] : memref<32x96xf32, #tpu.memory_space<vmem>>, vector<32x96xf32>
      tpu.vector_store %arg6[%c0_11, %c0_12], %12 {strides = array<i32>} : memref<32x96xf32, #tpu.memory_space<vmem>>, vector<32x96xf32>,
    } else {
    }
    %c0 = arith.constant 0 : index
    %c0_1 = arith.constant 0 : index
    %3 = vector.load %arg6[%c0, %c0_1] : memref<32x96xf32, #tpu.memory_space<vmem>>, vector<32x96xf32>
    %c0_2 = arith.constant 0 : index
    %c0_3 = arith.constant 0 : index
    %4 = vector.load %arg3[%c0_2, %c0_3] : memref<32x32xf32, #tpu.memory_space<vmem>>, vector<32x32xf32>
    %c0_4 = arith.constant 0 : index
    %c0_5 = arith.constant 0 : index
    %5 = vector.load %arg4[%c0_4, %c0_5] : memref<32x96xf32, #tpu.memory_space<vmem>>, vector<32x96xf32>
    %cst = arith.constant dense<0.000000e+00> : vector<32x96xf32>
    %6 = tpu.matmul %4, %5, %cst {dimension_numbers = #tpu.dot_dimension_numbers<[1], [0], [0], [1], [0, 0, 1, 1], [], []>} : vector<32x32xf32>, vector<32x96xf32>, vector<32x96xf32> -> vector<32x96xf32>
    %7 = arith.addf %3, %6 : vector<32x96xf32>
    %c0_6 = arith.constant 0 : index
    %c0_7 = arith.constant 0 : index
    %8 = vector.load %arg6[%c0_6, %c0_7] : memref<32x96xf32, #tpu.memory_space<vmem>>, vector<32x96xf32>
    tpu.vector_store %arg6[%c0_6, %c0_7], %7 {strides = array<i32>} : memref<32x96xf32, #tpu.memory_space<vmem>>, vector<32x96xf32>,
    %c0_i32_8 = arith.constant 0 : i32
    %9 = arith.cmpi eq, %arg2, %c0_i32_8 : i32
    %10 = arith.extui %9 : i1 to i32
    %c0_i32_9 = arith.constant 0 : i32
    %11 = arith.cmpi ne, %10, %c0_i32_9 : i32
    scf.if %11 {
      %c0_10 = arith.constant 0 : index
      %c0_11 = arith.constant 0 : index
      %12 = vector.load %arg6[%c0_10, %c0_11] : memref<32x96xf32, #tpu.memory_space<vmem>>, vector<32x96xf32>
      %c0_12 = arith.constant 0 : index
      %c0_13 = arith.constant 0 : index
      %13 = vector.load %arg5[%c0_12, %c0_13] : memref<32x96xf32, #tpu.memory_space<vmem>>, vector<32x96xf32>
      tpu.vector_store %arg5[%c0_12, %c0_13], %12 {strides = array<i32>} : memref<32x96xf32, #tpu.memory_space<vmem>>, vector<32x96xf32>,
    } else {
    }
    return
  }
  func.func @transform_0(%arg0: i32, %arg1: i32, %arg2: i32) -> (i32, i32) {
    %c0_i32 = arith.constant 0 : i32
    return %arg0, %arg2 : i32, i32
  }
  func.func @transform_1(%arg0: i32, %arg1: i32, %arg2: i32) -> (i32, i32) {
    %c0_i32 = arith.constant 0 : i32
    return %arg2, %arg1 : i32, i32
  }
  func.func @transform_2(%arg0: i32, %arg1: i32, %arg2: i32) -> (i32, i32) {
    %c0_i32 = arith.constant 0 : i32
    return %arg0, %arg1 : i32, i32
  }
}

</mosaic_0001>

<llo_original>
// kernel: tpu_custom_call.1
$region0: #{tpu_custom_call.1}
  #allocation0 [shape = 'u32[]', space=smem, size = 0x4, offset = 0x4, fixed_abs, tag = 'smem constant byte address 0x4 - core index']
  #allocation1 [shape = 'u32[144,128]{1,0:T(1,128)}', space=vmem, size = 0x12000, scoped, tag = 'internal scratch']
  #allocation2 [shape = 'f32[32,96]{1,0:T(8,128)}', space=vmem, size = 0x4000, scoped, tag = 'scratch operand']
  %s0 = inlined_call_operand.hbm [shape: f32[32,32], index: 0, kind: input, shape index: {}]
  %s1 = inlined_call_operand.hbm [shape: f32[32,96], index: 1, kind: input, shape index: {}]
  %s2 = inlined_call_operand.hbm [shape: f32[32,96], index: 2, kind: output, shape index: {}]
  %s3 = sld [smem:[#allocation0]]
  $region34: #{tpu_custom_call.1} parent=0
    _
  %s5 = ssub.s32 1, %s3
  %s6 = scalar_select 0, %s5, %s3
  $region1: #{tpu_custom_call.1} parent=0
    #allocation3 [shape = 'u8[16384]{0}', space=vmem, size = 0x4000, scoped, tag = 'input window, operand 0, single buffered']
    #allocation4 [shape = 's32[1]{0}', space=sflag, size = 0x4, scoped, tag = 'scoped memory for tpu_custom_call.1']
    #allocation5 [shape = 's32[1]{0}', space=sflag, size = 0x4, scoped, tag = 'scoped memory for tpu_custom_call.1']
    #allocation6 [shape = 'u8[16384]{0}', space=vmem, size = 0x4000, scoped, tag = 'input window, operand 1, single buffered']
    #allocation7 [shape = 's32[1]{0}', space=sflag, size = 0x4, scoped, tag = 'scoped memory for tpu_custom_call.1']
    #allocation8 [shape = 'u8[16384]{0}', space=vmem, size = 0x4000, scoped, tag = 'output window, operand 0, single buffered']
    %7 = vsyncpa [#allocation4], 0
    %8 = vsyncpa [#allocation7], 0
    %9 = vsyncpa [#allocation5], 0
    // Predicated region
    $region2: #{tpu_custom_call.1} parent=1 // pred_check
      _
    $region3: #{tpu_custom_call.1} parent=1 // pred_check_branch
      %11 = sbr.rel (0) target = $region5
    $region4: #{tpu_custom_call.1} parent=1 // pred_region
      %s13 = ssub.s32 512, 512
      %14 = vsyncadd [#allocation4], %s13
      %s15 = sshll.u32 [#allocation3], 4
      %s16 = int_to_ptr.vmem [resolvable:$true] %s15
      %21 = dma.hbm_to_vmem [thread:$0]  %s0, 512, %s16, [#allocation4], 128, 128, 8
    $region5: #{tpu_custom_call.1} parent=1 // pred_fallthru
      _
    // Predicated region
    $region6: #{tpu_custom_call.1} parent=1 // pred_check
      _
    $region7: #{tpu_custom_call.1} parent=1 // pred_check_branch
      %23 = sbr.rel (0) target = $region9
    $region8: #{tpu_custom_call.1} parent=1 // pred_region
      %s25 = ssub.s32 512, 512
      %26 = vsyncadd [#allocation7], %s25
      %s27 = sshll.u32 [#allocation6], 4
      %s28 = int_to_ptr.vmem [resolvable:$true] %s27
      %33 = dma.hbm_to_vmem [thread:$0]  %s1, 512, %s28, [#allocation7], 128, 128, 8
    $region9: #{tpu_custom_call.1} parent=1 // pred_fallthru
      _
    // Predicated region
    $region10: #{tpu_custom_call.1} parent=1 // pred_check
      _
    $region11: #{tpu_custom_call.1} parent=1 // pred_check_branch
      %35 = sbr.rel (0) target = $region13
    $region12: #{tpu_custom_call.1} parent=1 // pred_region
      %36 = dma.done [#allocation4], 512
    $region13: #{tpu_custom_call.1} parent=1 // pred_fallthru
      _
    // Predicated region
    $region14: #{tpu_custom_call.1} parent=1 // pred_check
      _
    $region15: #{tpu_custom_call.1} parent=1 // pred_check_branch
      %38 = sbr.rel (0) target = $region17
    $region16: #{tpu_custom_call.1} parent=1 // pred_region
      %39 = dma.done [#allocation7], 512
    $region17: #{tpu_custom_call.1} parent=1 // pred_fallthru
      _
    %p40 = scmp.eq.s32.totalorder 0, 0
    // Predicated region
    $region18: #{tpu_custom_call.1} parent=1 // pred_check
      %p41 = pneg %p40
    $region19: #{tpu_custom_call.1} parent=1 // pred_check_branch
      %43 = sbr.rel (%p41) target = $region21
    $region20: #{tpu_custom_call.1} parent=1 // pred_region
      %vm44 = vcmask 785408
      %45 = vst.msk [vmem:[#allocation2] sm:$0xff] %vm44, 0.0
      %46 = vst.msk [vmem:[#allocation2 + $0x8] sm:$0xff] %vm44, 0.0
      %47 = vst.msk [vmem:[#allocation2 + $0x10] sm:$0xff] %vm44, 0.0
      %48 = vst.msk [vmem:[#allocation2 + $0x18] sm:$0xff] %vm44, 0.0
    $region21: #{tpu_custom_call.1} parent=1 // pred_fallthru
      _
    %v49 = vld [vmem:[#allocation2] sm:$0xff]
    %v50 = vld [vmem:[#allocation2 + $0x8] sm:$0xff]
    %v51 = vld [vmem:[#allocation2 + $0x10] sm:$0xff]
    %v52 = vld [vmem:[#allocation2 + $0x18] sm:$0xff]
    %v53 = vld [vmem:[#allocation3] sm:$0xff]
    %v54 = vld [vmem:[#allocation3 + $0x8] sm:$0xff]
    %v55 = vld [vmem:[#allocation3 + $0x10] sm:$0xff]
    %v56 = vld [vmem:[#allocation3 + $0x18] sm:$0xff]
    %v57 = vld [vmem:[#allocation6] sm:$0xff]
    %v58 = vld [vmem:[#allocation6 + $0x8] sm:$0xff]
    %v59 = vld [vmem:[#allocation6 + $0x10] sm:$0xff]
    %v60 = vld [vmem:[#allocation6 + $0x18] sm:$0xff]
    %vm61 = vcmask 261120
    %v63 = vsel %vm61, %v53, 0
    %v66 = vsel %vm61, %v54, 0
    %v69 = vsel %vm61, %v55, 0
    %v72 = vsel %vm61, %v56, 0
    %74 = vmatprep.subr.mxu0 0.0
    %75 = vmatpush1.msra.mxu0 %v57
    %76 = vmatprep.subr.mxu0 0.0
    %77 = vmatpush1.msra.mxu0 %v58
    %78 = vmatprep.subr.mxu0 0.0
    %79 = vmatpush1.msra.mxu0 %v59
    %80 = vmatprep.subr.mxu0 0.0
    %81 = vmatpush1.msra.mxu0 %v60
    %82 = vmatprep.subr.mxu0 0.0
    %83 = vmatpush1.msra.mxu0 0.0
    %84 = vmatprep.subr.mxu0 0.0
    %85 = vmatpush1.msra.mxu0 0.0
    %86 = vmatprep.subr.mxu0 0.0
    %87 = vmatpush1.msra.mxu0 0.0
    %88 = vmatprep.subr.mxu0 0.0
    %89 = vmatpush1.msra.mxu0 0.0
    %90 = vmatprep.subr.mxu0 0.0
    %91 = vmatpush1.msra.mxu0 0.0
    %92 = vmatprep.subr.mxu0 0.0
    %93 = vmatpush1.msra.mxu0 0.0
    %94 = vmatprep.subr.mxu0 0.0
    %95 = vmatpush1.msra.mxu0 0.0
    %96 = vmatprep.subr.mxu0 0.0
    %97 = vmatpush1.msra.mxu0 0.0
    %98 = vmatprep.subr.mxu0 0.0
    %99 = vmatpush1.msra.mxu0 0.0
    %100 = vmatprep.subr.mxu0 0.0
    %101 = vmatpush1.msra.mxu0 0.0
    %102 = vmatprep.subr.mxu0 0.0
    %103 = vmatpush1.msra.mxu0 0.0
    %104 = vmatprep.subr.mxu0 0.0
    %105 = vmatpush1.msra.mxu0 0.0
    %106 = vmatprep.subr.mxu0 0.0
    %107 = vmatpush1.msra.mxu0 0.0
    %108 = vmatprep.subr.mxu0 0.0
    %109 = vmatpush1.msra.mxu0 0.0
    %110 = vmatprep.subr.mxu0 0.0
    %111 = vmatpush1.msra.mxu0 0.0
    %112 = vmatprep.subr.mxu0 0.0
    %113 = vmatpush1.msra.mxu0 0.0
    %114 = vmatprep.subr.mxu0 0.0
    %115 = vmatpush1.msra.mxu0 0.0
    %116 = vmatprep.subr.mxu0 0.0
    %117 = vmatpush1.msra.mxu0 0.0
    %118 = vmatprep.subr.mxu0 0.0
    %119 = vmatpush1.msra.mxu0 0.0
    %120 = vmatprep.subr.mxu0 0.0
    %121 = vmatpush1.msra.mxu0 0.0
    %122 = vmatprep.subr.mxu0 0.0
    %123 = vmatpush1.msra.mxu0 0.0
    %124 = vmatprep.subr.mxu0 0.0
    %125 = vmatpush1.msra.mxu0 0.0
    %126 = vmatprep.subr.mxu0 0.0
    %127 = vmatpush1.msra.mxu0 0.0
    %128 = vmatprep.subr.mxu0 0.0
    %129 = vmatpush1.msra.mxu0 0.0
    %130 = vmatprep.subr.mxu0 0.0
    %131 = vmatpush1.msra.mxu0 0.0
    %132 = vmatprep.subr.mxu0 0.0
    %133 = vmatpush1.msra.mxu0 0.0
    %134 = vmatprep.subr.mxu0 0.0
    %135 = vmatpush1.msra.mxu0 0.0
    %136 = vmatprep.subr.mxu0 0.0
    %137 = vmatpush1.msra.mxu0 0.0
    %138 = vmatprep.mubr.f32.mxu0 0.0
    %139 = vmatmul.mubr.f32.gmra.mrb[0].mxu0 %v63
    %v140 = vpop.f32.mrb[0].mxu0
    %v141 = vadd.f32 0.0, %v140
    %v142 = vpop.f32.mrb[0].mxu0
    %143 = vmatprep.mubr.f32.mxu0 0.0
    %144 = vmatmul.mubr.f32.gmra.mrb[0].mxu0 %v66
    %v145 = vpop.f32.mrb[0].mxu0
    %v146 = vadd.f32 0.0, %v145
    %v147 = vpop.f32.mrb[0].mxu0
    %148 = vmatprep.mubr.f32.mxu0 0.0
    %149 = vmatmul.mubr.f32.gmra.mrb[0].mxu0 %v69
    %v150 = vpop.f32.mrb[0].mxu0
    %v151 = vadd.f32 0.0, %v150
    %v152 = vpop.f32.mrb[0].mxu0
    %153 = vmatprep.mubr.f32.mxu0 0.0
    %154 = vmatmul.mubr.f32.gmra.mrb[0].mxu0 %v72
    %v155 = vpop.f32.mrb[0].mxu0
    %v156 = vadd.f32 0.0, %v155
    %v157 = vpop.f32.mrb[0].mxu0
    %158 = vdwg.mxu0
    %v159 = vadd.f32 %v49, %v141
    %v160 = vadd.f32 %v50, %v146
    %v161 = vadd.f32 %v51, %v151
    %v162 = vadd.f32 %v52, %v156
    %vm163 = vcmask 785408
    %164 = vst.msk [vmem:[#allocation2] sm:$0xff] %vm163, %v159
    %165 = vst.msk [vmem:[#allocation2 + $0x8] sm:$0xff] %vm163, %v160
    %166 = vst.msk [vmem:[#allocation2 + $0x10] sm:$0xff] %vm163, %v161
    %167 = vst.msk [vmem:[#allocation2 + $0x18] sm:$0xff] %vm163, %v162
    // Predicated region
    $region22: #{tpu_custom_call.1} parent=1 // pred_check
      %p168 = pneg %p40
    $region23: #{tpu_custom_call.1} parent=1 // pred_check_branch
      %170 = sbr.rel (%p168) target = $region25
    $region24: #{tpu_custom_call.1} parent=1 // pred_region
      %v171 = vld [vmem:[#allocation2] sm:$0xff]
      %v172 = vld [vmem:[#allocation2 + $0x8] sm:$0xff]
      %v173 = vld [vmem:[#allocation2 + $0x10] sm:$0xff]
      %v174 = vld [vmem:[#allocation2 + $0x18] sm:$0xff]
      %175 = vst.msk [vmem:[#allocation8] sm:$0xff] %vm163, %v171
      %176 = vst.msk [vmem:[#allocation8 + $0x8] sm:$0xff] %vm163, %v172
      %177 = vst.msk [vmem:[#allocation8 + $0x10] sm:$0xff] %vm163, %v173
      %178 = vst.msk [vmem:[#allocation8 + $0x18] sm:$0xff] %vm163, %v174
    $region25: #{tpu_custom_call.1} parent=1 // pred_fallthru
      _
    // Predicated region
    $region26: #{tpu_custom_call.1} parent=1 // pred_check
      _
    $region27: #{tpu_custom_call.1} parent=1 // pred_check_branch
      %180 = sbr.rel (0) target = $region29
    $region28: #{tpu_custom_call.1} parent=1 // pred_region
      %s182 = ssub.s32 512, 512
      %183 = vsyncadd [#allocation5], %s182
      %s184 = sshll.u32 [#allocation8], 4
      %s185 = int_to_ptr.vmem [resolvable:$true] %s184
      %190 = dma.vmem_to_hbm [thread:$0]  %s185, 512, %s2, [#allocation5], 128, 128, 8
    $region29: #{tpu_custom_call.1} parent=1 // pred_fallthru
      _
    // Predicated region
    $region30: #{tpu_custom_call.1} parent=1 // pred_check
      _
    $region31: #{tpu_custom_call.1} parent=1 // pred_check_branch
      %192 = sbr.rel (0) target = $region33
    $region32: #{tpu_custom_call.1} parent=1 // pred_region
      %193 = dma.done [#allocation5], 512
    $region33: #{tpu_custom_call.1} parent=1 // pred_fallthru
      _
    %194 = vsyncpa [#allocation4], 1
    %195 = vsyncpa [#allocation7], 1
    %196 = vsyncpa [#allocation5], 1

</llo_original>
